<compile_context>
chip_gen: v7x
topology: tpu7x:2x2x1
jax: 0.10.0
libtpu: 0.0.40
codegen_flags: <defaults>
</compile_context>

<pallas_src>
import jax
import jax.numpy as jnp
from jax.experimental import pallas as pl
from jax.experimental.pallas import tpu as pltpu


def _conv_mm_kernel(w_ref, b_ref, x_ref, o_ref):
    # w_ref: (Cout, 9*Cin)   resident weights (same block every grid step)
    # b_ref: (Cout, 1)       bias
    # x_ref: (1, 9*Cin, TS)  im2col patches for this (batch, spatial-tile)
    # o_ref: (1, Cout, TS)   output tile, lane-dense along spatial (TS % 128 == 0)
    acc = jnp.dot(w_ref[...], x_ref[0],
                  preferred_element_type=jnp.float32)      # (Cout, TS) on the MXU
    acc = acc + b_ref[...]                                 # (Cout, 1) broadcast
    o_ref[0] = jax.nn.sigmoid(acc).astype(o_ref.dtype)


def _pick_spatial_tile(hw, k9, cout, budget_bytes=12 << 20):
    """Largest multiple-of-128 divisor of hw whose double-buffered in+out
    blocks fit the VMEM budget; prefer >= 2 tiles so both v7x TCs get work."""
    if hw % 128 != 0:
        return hw  # fallback: single full tile (still correct)
    per_col = (k9 + cout) * 4 * 2  # f32, x-block + out-block, double buffered
    cands = [t for t in range(128, hw + 1, 128)
             if hw % t == 0 and t * per_col <= budget_bytes]
    if not cands:
        return 128
    multi = [t for t in cands if t <= hw // 2]
    return max(multi) if multi else max(cands)


def conv_transpose_sigmoid(x_nchw, w_tconv, bias):
    """x_nchw: (N, Cin, H, W) f32; w_tconv: (Cin, Cout, 3, 3); bias: (Cout,)."""
    N, Cin, H, W = x_nchw.shape
    Cout = w_tconv.shape[1]
    K9 = 9 * Cin
    HW = H * W

    # im2col in the wrapper: 9 contiguous slices + concat, done by XLA at HBM
    # bandwidth.  Layout (N, 9*Cin, H*W): patch-channels x spatial, so the
    # kernel's matmul RHS has the spatial axis in lanes.
    x_pad = jnp.pad(x_nchw, ((0, 0), (0, 0), (1, 1), (1, 1)))
    taps = [x_pad[:, :, kh:kh + H, kw:kw + W]
            for kh in range(3) for kw in range(3)]
    patches = jnp.concatenate(taps, axis=1).reshape(N, K9, HW)

    # Equivalent regular-conv weights as one (Cout, 9*Cin) matrix whose K
    # ordering matches `patches` ((kh,kw) major, cin minor).
    w_flip = w_tconv[:, :, ::-1, ::-1]                              # (Cin, Cout, 3, 3)
    wmat = jnp.transpose(w_flip, (2, 3, 0, 1)).reshape(K9, Cout).T  # (Cout, 9*Cin)
    b = bias.reshape(Cout, 1).astype(jnp.float32)

    ts = _pick_spatial_tile(HW, K9, Cout)
    grid = (N, HW // ts)

    out_flat = pl.pallas_call(
        _conv_mm_kernel,
        out_shape=jax.ShapeDtypeStruct((N, Cout, HW), x_nchw.dtype),
        grid_spec=pltpu.PrefetchScalarGridSpec(
            num_scalar_prefetch=0,
            grid=grid,
            in_specs=[
                pl.BlockSpec((Cout, K9), lambda n, t: (0, 0)),   # weights (resident)
                pl.BlockSpec((Cout, 1), lambda n, t: (0, 0)),    # bias (resident)
                pl.BlockSpec((1, K9, ts), lambda n, t: (n, 0, t)),
            ],
            out_specs=pl.BlockSpec((1, Cout, ts), lambda n, t: (n, 0, t)),
        ),
        compiler_params=pltpu.CompilerParams(
            dimension_semantics=("parallel", "parallel"),
            vmem_limit_bytes=32 * 1024 * 1024,
        ),
    )(wmat, b, patches)

    # (N, Cout, H*W) is already NCHW memory order -> free metadata reshape.
    return out_flat.reshape(N, Cout, H, W)


def reference(x_nchw, w_tconv, bias):
    # Pure-JAX reference: transposed conv via its equivalent regular conv.
    w_conv = jnp.transpose(w_tconv[:, :, ::-1, ::-1], (1, 0, 2, 3))  # (Cout, Cin, 3, 3)
    y = jax.lax.conv_general_dilated(
        x_nchw, w_conv, window_strides=(1, 1), padding=((1, 1), (1, 1)),
        dimension_numbers=("NCHW", "OIHW", "NCHW"))
    return jax.nn.sigmoid(y + bias[None, :, None, None])


if __name__ == "__main__":
    key = jax.random.PRNGKey(0)
    k_x, k_w, k_b = jax.random.split(key, 3)

    # Small shapes consistent with the module (Cin must be 32, Cout 64).
    N, Cin, H, W = 2, 32, 16, 16
    Cout = 64

    x = jax.random.normal(k_x, (N, Cin, H, W), dtype=jnp.float32)
    # ConvTranspose2d weight layout is (Cin, Cout, kH, kW).
    w_tconv = 0.1 * jax.random.normal(k_w, (Cin, Cout, 3, 3), dtype=jnp.float32)
    bias = 0.1 * jax.random.normal(k_b, (Cout,), dtype=jnp.float32)

    out = jax.block_until_ready(conv_transpose_sigmoid(x, w_tconv, bias))

    ref = jax.block_until_ready(reference(x, w_tconv, bias))
    assert out.shape == (N, Cout, H, W)
    assert jnp.allclose(out, ref, atol=1e-5, rtol=1e-5), \
        float(jnp.max(jnp.abs(out - ref)))

    print("KERNEL_OK")
</pallas_src>

<mosaic_0001>
module attributes {stable_mosaic.version = 11 : i64} {
  func.func @_conv_mm_kernel(%arg0: i32, %arg1: i32, %arg2: memref<64x288xf32, #tpu.memory_space<vmem>>, %arg3: memref<64x1xf32, #tpu.memory_space<vmem>>, %arg4: memref<1x288x128xf32, #tpu.memory_space<vmem>>, %arg5: memref<1x64x128xf32, #tpu.memory_space<vmem>>) attributes {dimension_semantics = [#tpu.dimension_semantics<parallel>, #tpu.dimension_semantics<parallel>], iteration_bounds = array<i64: 2, 2>, scalar_prefetch = 0 : i64, scratch_operands = 0 : i64, tpu.core_type = #tpu.core_type<tc>, window_params = [{pipeline_mode = #tpu.pipeline_mode<synchronous>, transform_indices = @transform_0, window_bounds = array<i64: 64, 288>}, {pipeline_mode = #tpu.pipeline_mode<synchronous>, transform_indices = @transform_1, window_bounds = array<i64: 64, 1>}, {transform_indices = @transform_2, window_bounds = array<i64: 1, 288, 128>}, {transform_indices = @transform_3, window_bounds = array<i64: 1, 64, 128>}]} {
    %c0 = arith.constant 0 : index
    %c0_0 = arith.constant 0 : index
    %0 = vector.load %arg2[%c0, %c0_0] : memref<64x288xf32, #tpu.memory_space<vmem>>, vector<64x288xf32>
    %c0_1 = arith.constant 0 : index
    %c0_2 = arith.constant 0 : index
    %c0_3 = arith.constant 0 : index
    %1 = vector.load %arg4[%c0_1, %c0_2, %c0_3] : memref<1x288x128xf32, #tpu.memory_space<vmem>>, vector<1x288x128xf32>
    %2 = vector.shape_cast %1 : vector<1x288x128xf32> to vector<288x128xf32>
    %cst = arith.constant dense<0.000000e+00> : vector<64x128xf32>
    %3 = tpu.matmul %0, %2, %cst {dimension_numbers = #tpu.dot_dimension_numbers<[1], [0], [0], [1], [0, 0, 1, 1], [], []>} : vector<64x288xf32>, vector<288x128xf32>, vector<64x128xf32> -> vector<64x128xf32>
    %c0_4 = arith.constant 0 : index
    %c0_5 = arith.constant 0 : index
    %4 = vector.load %arg3[%c0_4, %c0_5] : memref<64x1xf32, #tpu.memory_space<vmem>>, vector<64x1xf32>
    %5 = vector.broadcast %4 : vector<64x1xf32> to vector<64x128xf32>
    %6 = arith.addf %3, %5 : vector<64x128xf32>
    %7 = arith.negf %6 : vector<64x128xf32>
    %8 = math.exp %7 : vector<64x128xf32>
    %cst_6 = arith.constant 1.000000e+00 : f32
    %9 = vector.broadcast %cst_6 : f32 to vector<64x128xf32>
    %10 = arith.addf %9, %8 : vector<64x128xf32>
    %11 = arith.divf %9, %10 : vector<64x128xf32>
    %c0_7 = arith.constant 0 : index
    %c0_8 = arith.constant 0 : index
    %c0_9 = arith.constant 0 : index
    %12 = vector.load %arg5[%c0_7, %c0_8, %c0_9] : memref<1x64x128xf32, #tpu.memory_space<vmem>>, vector<1x64x128xf32>
    %13 = vector.shape_cast %12 : vector<1x64x128xf32> to vector<64x128xf32>
    %14 = vector.shape_cast %11 : vector<64x128xf32> to vector<1x64x128xf32>
    tpu.vector_store %arg5[%c0_7, %c0_8, %c0_9], %14 {strides = array<i32>} : memref<1x64x128xf32, #tpu.memory_space<vmem>>, vector<1x64x128xf32>,
    return
  }
  func.func @transform_0(%arg0: i32, %arg1: i32) -> (i32, i32) {
    %c0_i32 = arith.constant 0 : i32
    %c0_i32_0 = arith.constant 0 : i32
    %c0_i32_1 = arith.constant 0 : i32
    return %c0_i32, %c0_i32_0 : i32, i32
  }
  func.func @transform_1(%arg0: i32, %arg1: i32) -> (i32, i32) {
    %c0_i32 = arith.constant 0 : i32
    %c0_i32_0 = arith.constant 0 : i32
    %c0_i32_1 = arith.constant 0 : i32
    return %c0_i32, %c0_i32_0 : i32, i32
  }
  func.func @transform_2(%arg0: i32, %arg1: i32) -> (i32, i32, i32) {
    %c0_i32 = arith.constant 0 : i32
    %c0_i32_0 = arith.constant 0 : i32
    return %arg0, %c0_i32, %arg1 : i32, i32, i32
  }
  func.func @transform_3(%arg0: i32, %arg1: i32) -> (i32, i32, i32) {
    %c0_i32 = arith.constant 0 : i32
    %c0_i32_0 = arith.constant 0 : i32
    return %arg0, %c0_i32, %arg1 : i32, i32, i32
  }
}

</mosaic_0001>

<llo_original>
// kernel: tpu_custom_call.1
$region0: #{tpu_custom_call.1}
  #allocation0 [shape = 'u32[]', space=smem, size = 0x4, offset = 0x4, fixed_abs, tag = 'smem constant byte address 0x4 - core index']
  #allocation1 [shape = 'u32[144,128]{1,0:T(1,128)}', space=vmem, size = 0x12000, scoped, tag = 'internal scratch']
  %s0 = inlined_call_operand.hbm [shape: f32[64,288], index: 0, kind: input, shape index: {}]
  %s1 = inlined_call_operand.vmem [shape: f32[64,1], index: 1, kind: input, shape index: {}]
  %s2 = inlined_call_operand.hbm [shape: f32[2,288,256], index: 2, kind: input, shape index: {}]
  %s3 = inlined_call_operand.hbm [shape: f32[2,64,256], index: 3, kind: output, shape index: {}]
  %s4 = sld [smem:[#allocation0]]
  $region53: #{tpu_custom_call.1} parent=0
    _
  %s6 = ssub.s32 1, %s4
  %s7 = scalar_select 0, %s6, %s4
  $region1: #{tpu_custom_call.1} parent=0
    #allocation2 [shape = 'u8[98304]{0}', space=vmem, size = 0x18000, scoped, tag = 'input window, operand 0, single buffered']
    #allocation3 [shape = 's32[2]{0}', space=sflag, size = 0x8, scoped, tag = 'scoped memory for tpu_custom_call.1']
    #allocation4 [shape = 's32[2]{0}', space=sflag, size = 0x8, scoped, tag = 'scoped memory for tpu_custom_call.1']
    #allocation5 [shape = 'u8[294912]{0}', space=vmem, size = 0x48000, scoped, tag = 'input window, operand 2']
    #allocation6 [shape = 's32[2]{0}', space=sflag, size = 0x8, scoped, tag = 'scoped memory for tpu_custom_call.1']
    #allocation7 [shape = 'u8[65536]{0}', space=vmem, size = 0x10000, scoped, tag = 'output window, operand 0']
    %8 = vsyncpa [#allocation3], 0
    %9 = vsyncpa [#allocation6], 0
    %s10 = scalar_lea.sflag [#allocation6], 1
    %11 = vsyncpa %s10, 0
    %12 = vsyncpa [#allocation4], 0
    %s13 = scalar_lea.sflag [#allocation4], 1
    %14 = vsyncpa %s13, 0
    loop: start=0, step=1, limit=6
    $region2: #{tpu_custom_call.1} parent=1 // loop_pre_header
      _
    $region3: #{tpu_custom_call.1} parent=1 // loop_header
      %s16 = sphi 0, %s20
      %p17 = scmp.ge.s32.totalorder %s16, 6
      %s23 = sphi 0, %s35
      %s24 = sphi 0, %s31
      %s25 = sphi 0, %s23
      %s26 = sphi 0, %s24
      %s27 = sphi 0, %s25
      %s28 = sphi 0, %s26
      %s36 = sphi 0, %s36
      %s38 = sphi 0, %s36
      %s39 = sphi 0, %s38
      %s53 = sphi 0, %s39
      %s57 = sphi 0, %s57
      %s59 = sphi 0, %s57
      %s60 = sphi 0, %s59
      %s74 = sphi 0, %s60
      %s82 = sphi 0, %s84
      %s85 = sphi 0, %s82
      %s86 = sphi 0, %s85
      %s102 = sphi 0, %s86
      %s110 = sphi 0, %s112
      %s113 = sphi 0, %s110
      %s114 = sphi 0, %s113
      %s130 = sphi 0, %s114
    $region4: #{tpu_custom_call.1} parent=1 // loop_header_branch
      %19 = sbr.rel (%p17) target = $region8
    $region5: #{tpu_custom_call.1} parent=1 // loop_body
      %s21 = ssub.s32 %s16, 1
      %s22 = ssub.s32 %s16, 2
      %s29 = sadd.s32 1, %s24
      %p30 = scmp.ge.s32.totalorder %s29, 2
      %s31 = scalar_select %p30, 0, %s29
      %s32 = sadd.s32 1, %s23
      %s33 = scalar_select %p30, %s32, %s23
      %p34 = scmp.ge.s32.totalorder %s33, 2
      %s35 = scalar_select %p34, 0, %s33
      %s37 = sadd.s32 %s36, 1
      %p40 = scmp.eq.s32.totalorder %s16, 3
      %p41 = scmp.ne.s32.totalorder %s36, %s38
      %p42 = scmp.eq.s32.totalorder %s16, 0
      %p43 = por %p41, %p42
      %p44 = scmp.ne.s32.totalorder %s36, %s38
      %p45 = scmp.eq.s32.totalorder %s21, 3
      %p46 = por %p44, %p45
      %p47 = scmp.ne.s32.totalorder %s38, %s39
      %p48 = scmp.eq.s32.totalorder %s21, 0
      %p49 = por %p47, %p48
      %p50 = scmp.ne.s32.totalorder %s38, %s39
      %p51 = scmp.eq.s32.totalorder %s22, 3
      %p52 = por %p50, %p51
      %p54 = scmp.ne.s32.totalorder %s39, %s53
      %p55 = scmp.eq.s32.totalorder %s22, 0
      %p56 = por %p54, %p55
      %s58 = sadd.s32 %s57, 1
      %p61 = scmp.eq.s32.totalorder %s16, 3
      %p62 = scmp.ne.s32.totalorder %s57, %s59
      %p63 = scmp.eq.s32.totalorder %s16, 0
      %p64 = por %p62, %p63
      %p65 = scmp.ne.s32.totalorder %s57, %s59
      %p66 = scmp.eq.s32.totalorder %s21, 3
      %p67 = por %p65, %p66
      %p68 = scmp.ne.s32.totalorder %s59, %s60
      %p69 = scmp.eq.s32.totalorder %s21, 0
      %p70 = por %p68, %p69
      %p71 = scmp.ne.s32.totalorder %s59, %s60
      %p72 = scmp.eq.s32.totalorder %s22, 3
      %p73 = por %p71, %p72
      %p75 = scmp.ne.s32.totalorder %s60, %s74
      %p76 = scmp.eq.s32.totalorder %s22, 0
      %p77 = por %p75, %p76
      %s78 = ssub.s32 %s23, %s35
      %s79 = ssub.s32 %s24, %s31
      %s80 = sor.u32 %s78, %s79
      %p81 = scmp.eq.s32.totalorder %s80, 0
      %s83 = sadd.s32 %s82, 1
      %s84 = scalar_select %p81, %s82, %s83
      %p87 = pneg %p81
      %p88 = scmp.eq.s32.totalorder %s16, 3
      %p89 = por %p87, %p88
      %p90 = scmp.ne.s32.totalorder %s82, %s85
      %p91 = scmp.eq.s32.totalorder %s16, 0
      %p92 = por %p90, %p91
      %p93 = scmp.ne.s32.totalorder %s82, %s85
      %p94 = scmp.eq.s32.totalorder %s21, 3
      %p95 = por %p93, %p94
      %p96 = scmp.ne.s32.totalorder %s85, %s86
      %p97 = scmp.eq.s32.totalorder %s21, 0
      %p98 = por %p96, %p97
      %p99 = scmp.ne.s32.totalorder %s85, %s86
      %p100 = scmp.eq.s32.totalorder %s22, 3
      %p101 = por %p99, %p100
      %p103 = scmp.ne.s32.totalorder %s86, %s102
      %p104 = scmp.eq.s32.totalorder %s22, 0
      %p105 = por %p103, %p104
      %s106 = ssub.s32 %s23, %s35
      %s107 = ssub.s32 %s24, %s31
      %s108 = sor.u32 %s106, %s107
      %p109 = scmp.eq.s32.totalorder %s108, 0
      %s111 = sadd.s32 %s110, 1
      %s112 = scalar_select %p109, %s110, %s111
      %p115 = pneg %p109
      %p116 = scmp.eq.s32.totalorder %s16, 3
      %p117 = por %p115, %p116
      %p118 = scmp.ne.s32.totalorder %s110, %s113
      %p119 = scmp.eq.s32.totalorder %s16, 0
      %p120 = por %p118, %p119
      %p121 = scmp.ne.s32.totalorder %s110, %s113
      %p122 = scmp.eq.s32.totalorder %s21, 3
      %p123 = por %p121, %p122
      %p124 = scmp.ne.s32.totalorder %s113, %s114
      %p125 = scmp.eq.s32.totalorder %s21, 0
      %p126 = por %p124, %p125
      %p127 = scmp.ne.s32.totalorder %s113, %s114
      %p128 = scmp.eq.s32.totalorder %s22, 3
      %p129 = por %p127, %p128
      %p131 = scmp.ne.s32.totalorder %s114, %s130
      %p132 = scmp.eq.s32.totalorder %s22, 0
      %p133 = por %p131, %p132
      %p134 = scmp.le.s32.totalorder 1, %s16
      %p135 = scmp.lt.s32.totalorder %s16, 5
      %p136 = pnand %p134, %p135
      %p137 = pneg %p136
      // Predicated region
      $region9: #{tpu_custom_call.1} parent=5 // pred_check
        _
      $region10: #{tpu_custom_call.1} parent=5 // pred_check_branch
        %139 = sbr.rel (%p136) target = $region12
      $region11: #{tpu_custom_call.1} parent=5 // pred_region
        %s140 = ssub.s32 %s16, 1
        // Predicated region
        $region13: #{tpu_custom_call.1} parent=11 // pred_check
          %p141 = pneg %p49
        $region14: #{tpu_custom_call.1} parent=11 // pred_check_branch
          %143 = sbr.rel (%p141) target = $region16
        $region15: #{tpu_custom_call.1} parent=11 // pred_region
          %s145 = ssub.s32 3072, 3072
          %146 = vsyncadd [#allocation3], %s145
          %s147 = sshll.u32 [#allocation2], 4
          %s148 = int_to_ptr.vmem [resolvable:$true] %s147
          %153 = dma.hbm_to_vmem [thread:$0]  %s0, 3072, %s148, [#allocation3], 384, 384, 24
        $region16: #{tpu_custom_call.1} parent=11 // pred_fallthru
          _
        // Predicated region
        $region17: #{tpu_custom_call.1} parent=11 // pred_check
          %p154 = pneg %p70
        $region18: #{tpu_custom_call.1} parent=11 // pred_check_branch
          %156 = sbr.rel (%p154) target = $region20
        $region19: #{tpu_custom_call.1} parent=11 // pred_region
          _
        $region20: #{tpu_custom_call.1} parent=11 // pred_fallthru
          _
      $region12: #{tpu_custom_call.1} parent=5 // pred_fallthru
        _
      %p157 = scmp.lt.s32.totalorder %s16, 4
      // Predicated region
      $region21: #{tpu_custom_call.1} parent=5 // pred_check
        %p158 = pneg %p157
      $region22: #{tpu_custom_call.1} parent=5 // pred_check_branch
        %160 = sbr.rel (%p158) target = $region24
      $region23: #{tpu_custom_call.1} parent=5 // pred_region
        // Predicated region
        $region25: #{tpu_custom_call.1} parent=23 // pred_check
          %p161 = pneg %p92
        $region26: #{tpu_custom_call.1} parent=23 // pred_check_branch
          %163 = sbr.rel (%p161) target = $region28
        $region27: #{tpu_custom_call.1} parent=23 // pred_region
          %s164 = sand.u32 %s82, 1
          %s165 = scalar_lea.sflag [#allocation6], %s164
          %s166 = sand.u32 %s82, 1
          %s167 = smul.addr %s166, 288
          %s168 = scalar_lea.vmem [#allocation5], %s167
          %s170 = ssub.s32 4608, 4608
          %171 = vsyncadd %s165, %s170
          %s172 = smul.addr %s23, 72
          %s173 = sadd.s32 %s24, %s172
          %s174 = smul.addr %s173, 128
          %s175 = scalar_lea.hbm %s2, %s174
          %s176 = sshll.u32 %s168, 4
          %s177 = int_to_ptr.vmem [resolvable:$true] %s176
          %182 = dma.hbm_to_vmem [thread:$0]  %s175, 4608, %s177, %s165, 256, 128, 8
        $region28: #{tpu_custom_call.1} parent=23 // pred_fallthru
          _
      $region24: #{tpu_custom_call.1} parent=5 // pred_fallthru
        _
      %p183 = scmp.le.s32.totalorder 1, %s16
      %p184 = scmp.lt.s32.totalorder %s16, 5
      %p185 = pnand %p183, %p184
      %p186 = pneg %p185
      // Predicated region
      $region29: #{tpu_custom_call.1} parent=5 // pred_check
        _
      $region30: #{tpu_custom_call.1} parent=5 // pred_check_branch
        %188 = sbr.rel (%p185) target = $region32
      $region31: #{tpu_custom_call.1} parent=5 // pred_region
        %s189 = ssub.s32 %s16, 1
        // Predicated region
        $region33: #{tpu_custom_call.1} parent=31 // pred_check
          %p190 = pneg %p49
        $region34: #{tpu_custom_call.1} parent=31 // pred_check_branch
          %192 = sbr.rel (%p190) target = $region36
        $region35: #{tpu_custom_call.1} parent=31 // pred_region
          %193 = dma.done [#allocation3], 3072
        $region36: #{tpu_custom_call.1} parent=31 // pred_fallthru
          _
        %s194 = sand.u32 %s85, 1
        %s195 = scalar_lea.sflag [#allocation6], %s194
        %s196 = sand.u32 %s85, 1
        %s197 = smul.addr %s196, 288
        %s198 = scalar_lea.vmem [#allocation5], %s197
        // Predicated region
        $region37: #{tpu_custom_call.1} parent=31 // pred_check
          %p199 = pneg %p98
        $region38: #{tpu_custom_call.1} parent=31 // pred_check_branch
          %201 = sbr.rel (%p199) target = $region40
        $region39: #{tpu_custom_call.1} parent=31 // pred_region
          %202 = dma.done %s195, 4608
        $region40: #{tpu_custom_call.1} parent=31 // pred_fallthru
          _
        %p203 = pneg %p49
        %p204 = pneg %p46
        %p205 = pneg %p70
        %p206 = pneg %p67
        %s207 = sand.u32 %s85, 1
        %s208 = scalar_lea.sflag [#allocation6], %s207
        %s209 = sand.u32 %s85, 1
        %s210 = smul.addr %s209, 288
        %s211 = scalar_lea.vmem [#allocation5], %s210
        %p212 = pneg %p98
        %p213 = pneg %p95
        %p214 = pneg %p126
        %p215 = pneg %p123
        %s216 = sand.u32 %s113, 1
        %s217 = scalar_lea.sflag [#allocation4], %s216
        %s218 = sand.u32 %s113, 1
        %s219 = smul.addr %s218, 64
        %s220 = scalar_lea.vmem [#allocation7], %s219
        %v221 = vld [vmem:[#allocation2] sm:$0xff]
        %v222 = vld [vmem:[#allocation2 + $0x8] sm:$0xff]
        %v223 = vld [vmem:[#allocation2 + $0x10] sm:$0xff]
        %v224 = vld [vmem:[#allocation2 + $0x18] sm:$0xff]
        %v225 = vld [vmem:[#allocation2 + $0x20] sm:$0xff]
        %v226 = vld [vmem:[#allocation2 + $0x28] sm:$0xff]
        %v227 = vld [vmem:[#allocation2 + $0x30] sm:$0xff]
        %v228 = vld [vmem:[#allocation2 + $0x38] sm:$0xff]
        %v229 = vld [vmem:[#allocation2 + $0x40] sm:$0xff]
        %v230 = vld [vmem:[#allocation2 + $0x48] sm:$0xff]
        %v231 = vld [vmem:[#allocation2 + $0x50] sm:$0xff]
        %v232 = vld [vmem:[#allocation2 + $0x58] sm:$0xff]
        %v233 = vld [vmem:[#allocation2 + $0x60] sm:$0xff]
        %v234 = vld [vmem:[#allocation2 + $0x68] sm:$0xff]
        %v235 = vld [vmem:[#allocation2 + $0x70] sm:$0xff]
        %v236 = vld [vmem:[#allocation2 + $0x78] sm:$0xff]
        %v237 = vld [vmem:[#allocation2 + $0x80] sm:$0xff]
        %v238 = vld [vmem:[#allocation2 + $0x88] sm:$0xff]
        %v239 = vld [vmem:[#allocation2 + $0x90] sm:$0xff]
        %v240 = vld [vmem:[#allocation2 + $0x98] sm:$0xff]
        %v241 = vld [vmem:[#allocation2 + $0xa0] sm:$0xff]
        %v242 = vld [vmem:[#allocation2 + $0xa8] sm:$0xff]
        %v243 = vld [vmem:[#allocation2 + $0xb0] sm:$0xff]
        %v244 = vld [vmem:[#allocation2 + $0xb8] sm:$0xff]
        %v245 = vld [vmem:[%s198] sm:$0xff]
        %v246 = vld [vmem:[%s198 + $0x8] sm:$0xff]
        %v247 = vld [vmem:[%s198 + $0x10] sm:$0xff]
        %v248 = vld [vmem:[%s198 + $0x18] sm:$0xff]
        %v249 = vld [vmem:[%s198 + $0x20] sm:$0xff]
        %v250 = vld [vmem:[%s198 + $0x28] sm:$0xff]
        %v251 = vld [vmem:[%s198 + $0x30] sm:$0xff]
        %v252 = vld [vmem:[%s198 + $0x38] sm:$0xff]
        %v253 = vld [vmem:[%s198 + $0x40] sm:$0xff]
        %v254 = vld [vmem:[%s198 + $0x48] sm:$0xff]
        %v255 = vld [vmem:[%s198 + $0x50] sm:$0xff]
        %v256 = vld [vmem:[%s198 + $0x58] sm:$0xff]
        %v257 = vld [vmem:[%s198 + $0x60] sm:$0xff]
        %v258 = vld [vmem:[%s198 + $0x68] sm:$0xff]
        %v259 = vld [vmem:[%s198 + $0x70] sm:$0xff]
        %v260 = vld [vmem:[%s198 + $0x78] sm:$0xff]
        %v261 = vld [vmem:[%s198 + $0x80] sm:$0xff]
        %v262 = vld [vmem:[%s198 + $0x88] sm:$0xff]
        %v263 = vld [vmem:[%s198 + $0x90] sm:$0xff]
        %v264 = vld [vmem:[%s198 + $0x98] sm:$0xff]
        %v265 = vld [vmem:[%s198 + $0xa0] sm:$0xff]
        %v266 = vld [vmem:[%s198 + $0xa8] sm:$0xff]
        %v267 = vld [vmem:[%s198 + $0xb0] sm:$0xff]
        %v268 = vld [vmem:[%s198 + $0xb8] sm:$0xff]
        %v269 = vld [vmem:[%s198 + $0xc0] sm:$0xff]
        %v270 = vld [vmem:[%s198 + $0xc8] sm:$0xff]
        %v271 = vld [vmem:[%s198 + $0xd0] sm:$0xff]
        %v272 = vld [vmem:[%s198 + $0xd8] sm:$0xff]
        %v273 = vld [vmem:[%s198 + $0xe0] sm:$0xff]
        %v274 = vld [vmem:[%s198 + $0xe8] sm:$0xff]
        %v275 = vld [vmem:[%s198 + $0xf0] sm:$0xff]
        %v276 = vld [vmem:[%s198 + $0xf8] sm:$0xff]
        %v277 = vld [vmem:[%s198 + $0x100] sm:$0xff]
        %v278 = vld [vmem:[%s198 + $0x108] sm:$0xff]
        %v279 = vld [vmem:[%s198 + $0x110] sm:$0xff]
        %v280 = vld [vmem:[%s198 + $0x118] sm:$0xff]
        %v281 = vld [vmem:[%s1] sm:$0xff]
        %v282 = vld [vmem:[%s1 + $0x8] sm:$0xff]
        %v283 = vld [vmem:[%s1 + $0x10] sm:$0xff]
        %v284 = vld [vmem:[%s1 + $0x18] sm:$0xff]
        %v285 = vld [vmem:[%s1 + $0x20] sm:$0xff]
        %v286 = vld [vmem:[%s1 + $0x28] sm:$0xff]
        %v287 = vld [vmem:[%s1 + $0x30] sm:$0xff]
        %v288 = vld [vmem:[%s1 + $0x38] sm:$0xff]
        %290 = vset.pattern.permute.xlu0 0
        %291 = vperm.xlu0 %290, %v281
        %v292 = vpop.permute.xlu0 %291
        %295 = vset.pattern.permute.xlu0 0
        %296 = vperm.xlu0 %295, %v282
        %v297 = vpop.permute.xlu0 %296
        %300 = vset.pattern.permute.xlu0 0
        %301 = vperm.xlu0 %300, %v283
        %v302 = vpop.permute.xlu0 %301
        %305 = vset.pattern.permute.xlu0 0
        %306 = vperm.xlu0 %305, %v284
        %v307 = vpop.permute.xlu0 %306
        %310 = vset.pattern.permute.xlu0 0
        %311 = vperm.xlu0 %310, %v285
        %v312 = vpop.permute.xlu0 %311
        %315 = vset.pattern.permute.xlu0 0
        %316 = vperm.xlu0 %315, %v286
        %v317 = vpop.permute.xlu0 %316
        %320 = vset.pattern.permute.xlu0 0
        %321 = vperm.xlu0 %320, %v287
        %v322 = vpop.permute.xlu0 %321
        %325 = vset.pattern.permute.xlu0 0
        %326 = vperm.xlu0 %325, %v288
        %v327 = vpop.permute.xlu0 %326
        %vm329 = vcmask 261120
        %v331 = vsel %vm329, %v223, 0
        %v334 = vsel %vm329, %v226, 0
        %v337 = vsel %vm329, %v229, 0
        %v340 = vsel %vm329, %v232, 0
        %v343 = vsel %vm329, %v235, 0
        %v346 = vsel %vm329, %v238, 0
        %v349 = vsel %vm329, %v241, 0
        %v352 = vsel %vm329, %v244, 0
        %354 = vmatprep.subr.mxu0 0.0
        %355 = vmatpush1.msra.mxu0 %v245
        %356 = vmatprep.subr.mxu0 0.0
        %357 = vmatpush1.msra.mxu0 %v246
        %358 = vmatprep.subr.mxu0 0.0
        %359 = vmatpush1.msra.mxu0 %v247
        %360 = vmatprep.subr.mxu0 0.0
        %361 = vmatpush1.msra.mxu0 %v248
        %362 = vmatprep.subr.mxu0 0.0
        %363 = vmatpush1.msra.mxu0 %v249
        %364 = vmatprep.subr.mxu0 0.0
        %365 = vmatpush1.msra.mxu0 %v250
        %366 = vmatprep.subr.mxu0 0.0
        %367 = vmatpush1.msra.mxu0 %v251
        %368 = vmatprep.subr.mxu0 0.0
        %369 = vmatpush1.msra.mxu0 %v252
        %370 = vmatprep.subr.mxu0 0.0
        %371 = vmatpush1.msra.mxu0 %v253
        %372 = vmatprep.subr.mxu0 0.0
        %373 = vmatpush1.msra.mxu0 %v254
        %374 = vmatprep.subr.mxu0 0.0
        %375 = vmatpush1.msra.mxu0 %v255
        %376 = vmatprep.subr.mxu0 0.0
        %377 = vmatpush1.msra.mxu0 %v256
        %378 = vmatprep.subr.mxu0 0.0
        %379 = vmatpush1.msra.mxu0 %v257
        %380 = vmatprep.subr.mxu0 0.0
        %381 = vmatpush1.msra.mxu0 %v258
        %382 = vmatprep.subr.mxu0 0.0
        %383 = vmatpush1.msra.mxu0 %v259
        %384 = vmatprep.subr.mxu0 0.0
        %385 = vmatpush1.msra.mxu0 %v260
        %386 = vmatprep.subr.mxu0 0.0
        %387 = vmatpush1.msra.mxu0 %v261
        %388 = vmatprep.subr.mxu0 0.0
        %389 = vmatpush1.msra.mxu0 %v262
        %390 = vmatprep.subr.mxu0 0.0
        %391 = vmatpush1.msra.mxu0 %v263
        %392 = vmatprep.subr.mxu0 0.0
        %393 = vmatpush1.msra.mxu0 %v264
        %394 = vmatprep.subr.mxu0 0.0
        %395 = vmatpush1.msra.mxu0 %v265
        %396 = vmatprep.subr.mxu0 0.0
        %397 = vmatpush1.msra.mxu0 %v266
        %398 = vmatprep.subr.mxu0 0.0
        %399 = vmatpush1.msra.mxu0 %v267
        %400 = vmatprep.subr.mxu0 0.0
        %401 = vmatpush1.msra.mxu0 %v268
        %402 = vmatprep.subr.mxu0 0.0
        %403 = vmatpush1.msra.mxu0 %v269
        %404 = vmatprep.subr.mxu0 0.0
        %405 = vmatpush1.msra.mxu0 %v270
        %406 = vmatprep.subr.mxu0 0.0
        %407 = vmatpush1.msra.mxu0 %v271
        %408 = vmatprep.subr.mxu0 0.0
        %409 = vmatpush1.msra.mxu0 %v272
        %410 = vmatprep.subr.mxu0 0.0
        %411 = vmatpush1.msra.mxu0 %v273
        %412 = vmatprep.subr.mxu0 0.0
        %413 = vmatpush1.msra.mxu0 %v274
        %414 = vmatprep.subr.mxu0 0.0
        %415 = vmatpush1.msra.mxu0 %v275
        %416 = vmatprep.subr.mxu0 0.0
        %417 = vmatpush1.msra.mxu0 %v276
        %418 = vmatprep.mubr.f32.mxu0 %v222
        %419 = vmatmul.mubr.f32.gmra.mrb[0].mxu0 %v221
        %v420 = vpop.f32.mrb[0].mxu0
        %v421 = vadd.f32 %v292, %v420
        %v422 = vpop.f32.mrb[0].mxu0
        %423 = vmatprep.mubr.f32.mxu0 %v225
        %424 = vmatmul.mubr.f32.gmra.mrb[0].mxu0 %v224
        %v425 = vpop.f32.mrb[0].mxu0
        %v426 = vadd.f32 %v297, %v425
        %v427 = vpop.f32.mrb[0].mxu0
        %428 = vmatprep.mubr.f32.mxu0 %v228
        %429 = vmatmul.mubr.f32.gmra.mrb[0].mxu0 %v227
        %v430 = vpop.f32.mrb[0].mxu0
        %v431 = vadd.f32 %v302, %v430
        %v432 = vpop.f32.mrb[0].mxu0
        %433 = vmatprep.mubr.f32.mxu0 %v231
        %434 = vmatmul.mubr.f32.gmra.mrb[0].mxu0 %v230
        %v435 = vpop.f32.mrb[0].mxu0
        %v436 = vadd.f32 %v307, %v435
        %v437 = vpop.f32.mrb[0].mxu0
        %438 = vmatprep.mubr.f32.mxu0 %v234
        %439 = vmatmul.mubr.f32.gmra.mrb[0].mxu0 %v233
        %v440 = vpop.f32.mrb[0].mxu0
        %v441 = vadd.f32 %v312, %v440
        %v442 = vpop.f32.mrb[0].mxu0
        %443 = vmatprep.mubr.f32.mxu0 %v237
        %444 = vmatmul.mubr.f32.gmra.mrb[0].mxu0 %v236
        %v445 = vpop.f32.mrb[0].mxu0
        %v446 = vadd.f32 %v317, %v445
        %v447 = vpop.f32.mrb[0].mxu0
        %448 = vmatprep.mubr.f32.mxu0 %v240
        %449 = vmatmul.mubr.f32.gmra.mrb[0].mxu0 %v239
        %v450 = vpop.f32.mrb[0].mxu0
        %v451 = vadd.f32 %v322, %v450
        %v452 = vpop.f32.mrb[0].mxu0
        %453 = vmatprep.mubr.f32.mxu0 %v243
        %454 = vmatmul.mubr.f32.gmra.mrb[0].mxu0 %v242
        %v455 = vpop.f32.mrb[0].mxu0
        %v456 = vadd.f32 %v327, %v455
        %v457 = vpop.f32.mrb[0].mxu0
        %458 = vdwg.mxu0
        %459 = vmatprep.subr.mxu0 0.0
        %460 = vmatpush1.msra.mxu0 %v277
        %461 = vmatprep.subr.mxu0 0.0
        %462 = vmatpush1.msra.mxu0 %v278
        %463 = vmatprep.subr.mxu0 0.0
        %464 = vmatpush1.msra.mxu0 %v279
        %465 = vmatprep.subr.mxu0 0.0
        %466 = vmatpush1.msra.mxu0 %v280
        %467 = vmatprep.subr.mxu0 0.0
        %468 = vmatpush1.msra.mxu0 0.0
        %469 = vmatprep.subr.mxu0 0.0
        %470 = vmatpush1.msra.mxu0 0.0
        %471 = vmatprep.subr.mxu0 0.0
        %472 = vmatpush1.msra.mxu0 0.0
        %473 = vmatprep.subr.mxu0 0.0
        %474 = vmatpush1.msra.mxu0 0.0
        %475 = vmatprep.subr.mxu0 0.0
        %476 = vmatpush1.msra.mxu0 0.0
        %477 = vmatprep.subr.mxu0 0.0
        %478 = vmatpush1.msra.mxu0 0.0
        %479 = vmatprep.subr.mxu0 0.0
        %480 = vmatpush1.msra.mxu0 0.0
        %481 = vmatprep.subr.mxu0 0.0
        %482 = vmatpush1.msra.mxu0 0.0
        %483 = vmatprep.subr.mxu0 0.0
        %484 = vmatpush1.msra.mxu0 0.0
        %485 = vmatprep.subr.mxu0 0.0
        %486 = vmatpush1.msra.mxu0 0.0
        %487 = vmatprep.subr.mxu0 0.0
        %488 = vmatpush1.msra.mxu0 0.0
        %489 = vmatprep.subr.mxu0 0.0
        %490 = vmatpush1.msra.mxu0 0.0
        %491 = vmatprep.subr.mxu0 0.0
        %492 = vmatpush1.msra.mxu0 0.0
        %493 = vmatprep.subr.mxu0 0.0
        %494 = vmatpush1.msra.mxu0 0.0
        %495 = vmatprep.subr.mxu0 0.0
        %496 = vmatpush1.msra.mxu0 0.0
        %497 = vmatprep.subr.mxu0 0.0
        %498 = vmatpush1.msra.mxu0 0.0
        %499 = vmatprep.subr.mxu0 0.0
        %500 = vmatpush1.msra.mxu0 0.0
        %501 = vmatprep.subr.mxu0 0.0
        %502 = vmatpush1.msra.mxu0 0.0
        %503 = vmatprep.subr.mxu0 0.0
        %504 = vmatpush1.msra.mxu0 0.0
        %505 = vmatprep.subr.mxu0 0.0
        %506 = vmatpush1.msra.mxu0 0.0
        %507 = vmatprep.subr.mxu0 0.0
        %508 = vmatpush1.msra.mxu0 0.0
        %509 = vmatprep.subr.mxu0 0.0
        %510 = vmatpush1.msra.mxu0 0.0
        %511 = vmatprep.subr.mxu0 0.0
        %512 = vmatpush1.msra.mxu0 0.0
        %513 = vmatprep.subr.mxu0 0.0
        %514 = vmatpush1.msra.mxu0 0.0
        %515 = vmatprep.subr.mxu0 0.0
        %516 = vmatpush1.msra.mxu0 0.0
        %517 = vmatprep.subr.mxu0 0.0
        %518 = vmatpush1.msra.mxu0 0.0
        %519 = vmatprep.subr.mxu0 0.0
        %520 = vmatpush1.msra.mxu0 0.0
        %521 = vmatprep.subr.mxu0 0.0
        %522 = vmatpush1.msra.mxu0 0.0
        %523 = vmatprep.mubr.f32.mxu0 0.0
        %524 = vmatmul.mubr.f32.gmra.mrb[0].mxu0 %v331
        %v525 = vpop.f32.mrb[0].mxu0
        %v526 = vadd.f32 %v421, %v525
        %v527 = vpop.f32.mrb[0].mxu0
        %528 = vmatprep.mubr.f32.mxu0 0.0
        %529 = vmatmul.mubr.f32.gmra.mrb[0].mxu0 %v334
        %v530 = vpop.f32.mrb[0].mxu0
        %v531 = vadd.f32 %v426, %v530
        %v532 = vpop.f32.mrb[0].mxu0
        %533 = vmatprep.mubr.f32.mxu0 0.0
        %534 = vmatmul.mubr.f32.gmra.mrb[0].mxu0 %v337
        %v535 = vpop.f32.mrb[0].mxu0
        %v536 = vadd.f32 %v431, %v535
        %v537 = vpop.f32.mrb[0].mxu0
        %538 = vmatprep.mubr.f32.mxu0 0.0
        %539 = vmatmul.mubr.f32.gmra.mrb[0].mxu0 %v340
        %v540 = vpop.f32.mrb[0].mxu0
        %v541 = vadd.f32 %v436, %v540
        %v542 = vpop.f32.mrb[0].mxu0
        %543 = vmatprep.mubr.f32.mxu0 0.0
        %544 = vmatmul.mubr.f32.gmra.mrb[0].mxu0 %v343
        %v545 = vpop.f32.mrb[0].mxu0
        %v546 = vadd.f32 %v441, %v545
        %v547 = vpop.f32.mrb[0].mxu0
        %548 = vmatprep.mubr.f32.mxu0 0.0
        %549 = vmatmul.mubr.f32.gmra.mrb[0].mxu0 %v346
        %v550 = vpop.f32.mrb[0].mxu0
        %v551 = vadd.f32 %v446, %v550
        %v552 = vpop.f32.mrb[0].mxu0
        %553 = vmatprep.mubr.f32.mxu0 0.0
        %554 = vmatmul.mubr.f32.gmra.mrb[0].mxu0 %v349
        %v555 = vpop.f32.mrb[0].mxu0
        %v556 = vadd.f32 %v451, %v555
        %v557 = vpop.f32.mrb[0].mxu0
        %558 = vmatprep.mubr.f32.mxu0 0.0
        %559 = vmatmul.mubr.f32.gmra.mrb[0].mxu0 %v352
        %v560 = vpop.f32.mrb[0].mxu0
        %v561 = vadd.f32 %v456, %v560
        %v562 = vpop.f32.mrb[0].mxu0
        %563 = vdwg.mxu0
        %v564 = vxor.u32 %v526, 2147483648
        %v565 = vxor.u32 %v531, 2147483648
        %v566 = vxor.u32 %v536, 2147483648
        %v567 = vxor.u32 %v541, 2147483648
        %v568 = vxor.u32 %v546, 2147483648
        %v569 = vxor.u32 %v551, 2147483648
        %v570 = vxor.u32 %v556, 2147483648
        %v571 = vxor.u32 %v561, 2147483648
        %v572 = vmul.f32 %v564, 1.442695
        %v573 = vpow.pop %v572
        %v574 = vmul.f32 %v565, 1.442695
        %v575 = vpow.pop %v574
        %v576 = vmul.f32 %v566, 1.442695
        %v577 = vpow.pop %v576
        %v578 = vmul.f32 %v567, 1.442695
        %v579 = vpow.pop %v578
        %v580 = vmul.f32 %v568, 1.442695
        %v581 = vpow.pop %v580
        %v582 = vmul.f32 %v569, 1.442695
        %v583 = vpow.pop %v582
        %v584 = vmul.f32 %v570, 1.442695
        %v585 = vpow.pop %v584
        %v586 = vmul.f32 %v571, 1.442695
        %v587 = vpow.pop %v586
        %v588 = vadd.f32 %v573, 1.0
        %v589 = vadd.f32 %v575, 1.0
        %v590 = vadd.f32 %v577, 1.0
        %v591 = vadd.f32 %v579, 1.0
        %v592 = vadd.f32 %v581, 1.0
        %v593 = vadd.f32 %v583, 1.0
        %v594 = vadd.f32 %v585, 1.0
        %v595 = vadd.f32 %v587, 1.0
        %v596 = vrcp.pop %v588
        %v597 = vmul.f32 1.0, %v596
        %v598 = vrcp.pop %v589
        %v599 = vmul.f32 1.0, %v598
        %v600 = vrcp.pop %v590
        %v601 = vmul.f32 1.0, %v600
        %v602 = vrcp.pop %v591
        %v603 = vmul.f32 1.0, %v602
        %v604 = vrcp.pop %v592
        %v605 = vmul.f32 1.0, %v604
        %v606 = vrcp.pop %v593
        %v607 = vmul.f32 1.0, %v606
        %v608 = vrcp.pop %v594
        %v609 = vmul.f32 1.0, %v608
        %v610 = vrcp.pop %v595
        %v611 = vmul.f32 1.0, %v610
        %612 = vst [vmem:[%s220] sm:$0xff] %v597
        %613 = vst [vmem:[%s220 + $0x8] sm:$0xff] %v599
        %614 = vst [vmem:[%s220 + $0x10] sm:$0xff] %v601
        %615 = vst [vmem:[%s220 + $0x18] sm:$0xff] %v603
        %616 = vst [vmem:[%s220 + $0x20] sm:$0xff] %v605
        %617 = vst [vmem:[%s220 + $0x28] sm:$0xff] %v607
        %618 = vst [vmem:[%s220 + $0x30] sm:$0xff] %v609
        %619 = vst [vmem:[%s220 + $0x38] sm:$0xff] %v611
        %s620 = sand.u32 %s113, 1
        %s621 = scalar_lea.sflag [#allocation4], %s620
        %s622 = sand.u32 %s113, 1
        %s623 = smul.addr %s622, 64
        %s624 = scalar_lea.vmem [#allocation7], %s623
        // Predicated region
        $region41: #{tpu_custom_call.1} parent=31 // pred_check
          %p625 = pneg %p123
        $region42: #{tpu_custom_call.1} parent=31 // pred_check_branch
          %627 = sbr.rel (%p625) target = $region44
        $region43: #{tpu_custom_call.1} parent=31 // pred_region
          %s629 = ssub.s32 1024, 1024
          %630 = vsyncadd %s621, %s629
          %s631 = smul.addr %s25, 16
          %s632 = sadd.s32 %s26, %s631
          %s633 = smul.addr %s632, 128
          %s634 = scalar_lea.hbm %s3, %s633
          %s635 = sshll.u32 %s624, 4
          %s636 = int_to_ptr.vmem [resolvable:$true] %s635
          %641 = dma.vmem_to_hbm [thread:$0]  %s636, 1024, %s634, %s621, 128, 256, 8
        $region44: #{tpu_custom_call.1} parent=31 // pred_fallthru
          _
      $region32: #{tpu_custom_call.1} parent=5 // pred_fallthru
        _
      %p642 = scmp.le.s32.totalorder 2, %s16
      // Predicated region
      $region45: #{tpu_custom_call.1} parent=5 // pred_check
        %p643 = pneg %p642
      $region46: #{tpu_custom_call.1} parent=5 // pred_check_branch
        %645 = sbr.rel (%p643) target = $region48
      $region47: #{tpu_custom_call.1} parent=5 // pred_region
        %s646 = ssub.s32 %s16, 2
        // Predicated region
        $region49: #{tpu_custom_call.1} parent=47 // pred_check
          %p647 = pneg %p129
        $region50: #{tpu_custom_call.1} parent=47 // pred_check_branch
          %649 = sbr.rel (%p647) target = $region52
        $region51: #{tpu_custom_call.1} parent=47 // pred_region
          %s650 = sand.u32 %s114, 1
          %s651 = scalar_lea.sflag [#allocation4], %s650
          %s652 = sand.u32 %s114, 1
          %s653 = smul.addr %s652, 64
          %s654 = scalar_lea.vmem [#allocation7], %s653
          %655 = dma.done %s651, 1024
        $region52: #{tpu_custom_call.1} parent=47 // pred_fallthru
          _
      $region48: #{tpu_custom_call.1} parent=5 // pred_fallthru
        _
    $region6: #{tpu_custom_call.1} parent=1 // loop_footer
      %s20 = sadd.s32 1, %s16
    $region7: #{tpu_custom_call.1} parent=1 // loop_footer_branch
      %15 = sbr.rel target = $region3
    $region8: #{tpu_custom_call.1} parent=1 // loop_exit
      _
    %656 = vsyncpa [#allocation3], 1
    %s657 = scalar_lea.sflag [#allocation3], 1
    %658 = vsyncpa %s657, 1
    %659 = vsyncpa [#allocation6], 1
    %s660 = scalar_lea.sflag [#allocation6], 1
    %661 = vsyncpa %s660, 1
    %662 = vsyncpa [#allocation4], 1
    %s663 = scalar_lea.sflag [#allocation4], 1
    %664 = vsyncpa %s663, 1

</llo_original>
